<compile_context>
chip_gen: v7x
topology: tpu7x:2x2x1
jax: 0.10.0
libtpu: 0.0.40
codegen_flags: <defaults>
</compile_context>

<pallas_src>
import jax
import jax.numpy as jnp
from jax import lax
from jax.experimental import pallas as pl
from jax.experimental.pallas import tpu as pltpu

# -------------------- model hyper-parameters (match nn.Module defaults) -----
NB_FEATURES = 7
NB_HIDDEN = 7              # nb_neurons_intermediate_layer
NB_INTERMEDIATE = 3        # nb_intermediate_layers
NB_CLASSES = 2
NB_LAYERS = NB_INTERMEDIATE + 2   # input + 3 intermediate + output = 5

DIM_PAD = 8                # feature/hidden/class dim padded to one sublane group
LANE = 128                 # batch lives on lanes -> pad batch to multiples of 128
TILE_B = 2048              # batch lanes per grid step (sweep 2048..8192)


def _round_up(n, m):
    return ((n + m - 1) // m) * m


# ----------------------------- kernel ---------------------------------------
def _titanic_kernel(x_ref, w_ref, o_ref):
    """Feature-major MLP on one batch tile.

    x_ref : (8, T) f32  — rows 0..6 = features, row 7 = constant 1 (bias lane),
                          batch on lanes.
    w_ref : (5, 8, 8) f32 — per-layer weights in (out, in) orientation; column 7
                          holds the bias, element [7,7] = 1 keeps the ones-row
                          alive through the network; everything else zero-padded.
    o_ref : (8, T) f32  — row 0 = P(not survived), row 1 = P(survived).

    Real dims are <= 7, so each Linear is 8 broadcast-FMAs on the VPU (the MXU
    would spend >99% of its cycles multiplying structural zeros).
    """
    h = x_ref[...]                                         # (8, T) f32

    for l in range(NB_LAYERS):                             # static unroll (5)
        w = w_ref[l]                                       # (8, 8) f32
        # y = W_aug @ h  as outer-product accumulation over the 8 input rows
        acc = w[:, 0:1] * h[0:1, :]                        # (8,1)*(1,T) -> (8,T)
        for k in range(1, DIM_PAD):
            acc = acc + w[:, k:k + 1] * h[k:k + 1, :]
        # ReLU on all but the output layer; the ones-row stays 1 (relu(1)=1)
        h = jnp.maximum(acc, 0.0) if l < NB_LAYERS - 1 else acc

    # 2-class softmax == sigmoid of the logit difference: exact, no mask/iota,
    # no cross-lane reductions, rows sum to exactly 1.
    l0 = h[0:1, :]                                         # logit "not survived"
    l1 = h[1:2, :]                                         # logit "survived"
    p1 = 1.0 / (1.0 + jnp.exp(l0 - l1))                    # P(survived)
    p0 = 1.0 - p1                                          # P(not survived)

    o_ref[...] = jnp.zeros_like(o_ref)
    o_ref[0:1, :] = p0
    o_ref[1:2, :] = p1


# ----------------------------- params ---------------------------------------
def init_params(key):
    """torch.nn.Linear-style init (uniform +-1/sqrt(fan_in)).

    Weights are in PyTorch (out_features, in_features) orientation.
    """
    ks = jax.random.split(key, 2 * NB_LAYERS)

    def lin(kw, kb, fan_in, fan_out):
        bound = 1.0 / jnp.sqrt(float(fan_in))
        w = jax.random.uniform(kw, (fan_out, fan_in), jnp.float32, -bound, bound)
        b = jax.random.uniform(kb, (fan_out,), jnp.float32, -bound, bound)
        return w, b

    dims = ([(NB_FEATURES, NB_HIDDEN)]
            + [(NB_HIDDEN, NB_HIDDEN)] * NB_INTERMEDIATE
            + [(NB_HIDDEN, NB_CLASSES)])
    ws, bs = [], []
    for i, (fi, fo) in enumerate(dims):
        w, b = lin(ks[2 * i], ks[2 * i + 1], fi, fo)
        ws.append(w)
        bs.append(b)
    return ws, bs


def pack_params(ws, bs):
    """Pad + stack the 5 layers ONCE (hoisted out of the per-call path).

    Returns a (5, 8, 8) f32 array: rows = out dim, cols = in dim, column 7 is
    the bias (consumed by the constant ones-row of the activations), element
    [7, 7] = 1 so the ones-row propagates, zeros elsewhere.
    """
    W = jnp.zeros((NB_LAYERS, DIM_PAD, DIM_PAD), jnp.float32)
    for l, (w, b) in enumerate(zip(ws, bs)):
        W = W.at[l, : w.shape[0], : w.shape[1]].set(w)
        W = W.at[l, : b.shape[0], DIM_PAD - 1].set(b)      # bias column
        W = W.at[l, DIM_PAD - 1, DIM_PAD - 1].set(1.0)     # keep ones-row alive
    return W


# ----------------------------- forward --------------------------------------
def _choose_tile(batch):
    bp_min = _round_up(batch, LANE)
    tile = min(TILE_B, bp_min)
    # Keep >= 2 grid steps when the batch spans more than one lane block so the
    # "parallel" batch axis can actually shard across v7x's two TensorCores.
    if tile == bp_min and bp_min > LANE:
        tile = _round_up((batch + 1) // 2, LANE)
    return tile, _round_up(batch, tile)


def titanic_forward(w_packed, pclass, sex, age, sibsp, parch, fare, embarked):
    # torch.stack((...), dim=1).float(), kept feature-major: (7, B) f32
    x = jnp.stack([pclass, sex, age, sibsp, parch, fare, embarked],
                  axis=0).astype(jnp.float32)
    B = x.shape[1]
    tile_b, BP = _choose_tile(B)

    x_pad = jnp.zeros((DIM_PAD, BP), jnp.float32)
    x_pad = x_pad.at[:NB_FEATURES, :B].set(x)
    x_pad = x_pad.at[NB_FEATURES, :].set(1.0)              # bias / ones row

    out = pl.pallas_call(
        _titanic_kernel,
        out_shape=jax.ShapeDtypeStruct((DIM_PAD, BP), jnp.float32),
        grid=(BP // tile_b,),
        in_specs=[
            pl.BlockSpec((DIM_PAD, tile_b), lambda i: (0, i)),               # x tile
            pl.BlockSpec((NB_LAYERS, DIM_PAD, DIM_PAD), lambda i: (0, 0, 0)),  # weights (resident)
        ],
        out_specs=pl.BlockSpec((DIM_PAD, tile_b), lambda i: (0, i)),
        compiler_params=pltpu.CompilerParams(
            dimension_semantics=("parallel",),             # megacore on v7x
            vmem_limit_bytes=32 << 20),
    )(x_pad, w_packed)

    # rows 0/1 of the class-major slab -> (B, 2) = [P(not survived), P(survived)]
    return out[:NB_CLASSES, :B].T


# ----------------------------- reference (for checking) ---------------------
def reference_forward(ws, bs, pclass, sex, age, sibsp, parch, fare, embarked):
    """Pure-JAX f32 reference mirroring the PyTorch forward."""
    x = jnp.stack([pclass, sex, age, sibsp, parch, fare, embarked],
                  axis=1).astype(jnp.float32)              # (B, 7)
    h = x
    for l, (w, b) in enumerate(zip(ws, bs)):
        h = jnp.dot(h, w.T, precision=lax.Precision.HIGHEST) + b
        if l < NB_LAYERS - 1:
            h = jnp.maximum(h, 0.0)
    return jax.nn.softmax(h, axis=1)


# ----------------------------- demo ------------------------------------------
# NOTE: compute_loss / batch (loss + optimizer step) are host-side training
# utilities and intentionally not part of the forward kernel.
if __name__ == "__main__":
    key = jax.random.PRNGKey(0)
    pkey, dkey = jax.random.split(key)
    ws, bs = init_params(pkey)
    w_packed = pack_params(ws, bs)        # padded/stacked once, outside the call

    B = 8  # small batch
    dks = jax.random.split(dkey, 7)
    pclass = jax.random.randint(dks[0], (B,), 1, 4).astype(jnp.float32)
    sex = jax.random.randint(dks[1], (B,), 0, 2).astype(jnp.float32)
    age = jax.random.uniform(dks[2], (B,), jnp.float32, 1.0, 80.0)
    sibsp = jax.random.randint(dks[3], (B,), 0, 5).astype(jnp.float32)
    parch = jax.random.randint(dks[4], (B,), 0, 4).astype(jnp.float32)
    fare = jax.random.uniform(dks[5], (B,), jnp.float32, 5.0, 100.0)
    embarked = jax.random.randint(dks[6], (B,), 0, 3).astype(jnp.float32)

    fwd = jax.jit(titanic_forward)
    out = jax.block_until_ready(
        fwd(w_packed, pclass, sex, age, sibsp, parch, fare, embarked))

    # sanity: shape, finite, rows sum to 1 (exact sigmoid epilogue), match f32 ref
    assert out.shape == (B, NB_CLASSES)
    assert bool(jnp.all(jnp.isfinite(out)))
    assert jnp.allclose(jnp.sum(out, axis=1), 1.0, atol=1e-5)
    ref = reference_forward(ws, bs, pclass, sex, age, sibsp, parch, fare, embarked)
    assert jnp.allclose(out, ref, atol=1e-3, rtol=1e-3), (out, ref)

    print("KERNEL_OK")
</pallas_src>

<mosaic_0001>
module attributes {stable_mosaic.version = 11 : i64} {
  func.func @_titanic_kernel(%arg0: i32, %arg1: memref<8x128xf32, #tpu.memory_space<vmem>>, %arg2: memref<5x8x8xf32, #tpu.memory_space<vmem>>, %arg3: memref<8x128xf32, #tpu.memory_space<vmem>>) attributes {dimension_semantics = [#tpu.dimension_semantics<parallel>], iteration_bounds = array<i64: 1>, scalar_prefetch = 0 : i64, scratch_operands = 0 : i64, tpu.core_type = #tpu.core_type<tc>, window_params = [{transform_indices = @transform_0, window_bounds = array<i64: 8, 128>}, {pipeline_mode = #tpu.pipeline_mode<synchronous>, transform_indices = @transform_1, window_bounds = array<i64: 5, 8, 8>}, {transform_indices = @transform_2, window_bounds = array<i64: 8, 128>}]} {
    %c0 = arith.constant 0 : index
    %c0_0 = arith.constant 0 : index
    %0 = vector.load %arg1[%c0, %c0_0] : memref<8x128xf32, #tpu.memory_space<vmem>>, vector<8x128xf32>
    %c0_1 = arith.constant 0 : index
    %c0_2 = arith.constant 0 : index
    %c0_3 = arith.constant 0 : index
    %1 = vector.load %arg2[%c0_1, %c0_2, %c0_3] : memref<5x8x8xf32, #tpu.memory_space<vmem>>, vector<1x8x8xf32>
    %2 = vector.shape_cast %1 : vector<1x8x8xf32> to vector<8x8xf32>
    %3 = vector.extract_strided_slice %2 {offsets = [0, 0], sizes = [8, 1], strides = [1, 1]} : vector<8x8xf32> to vector<8x1xf32>
    %4 = vector.extract_strided_slice %0 {offsets = [0, 0], sizes = [1, 128], strides = [1, 1]} : vector<8x128xf32> to vector<1x128xf32>
    %5 = vector.broadcast %3 : vector<8x1xf32> to vector<8x128xf32>
    %6 = vector.broadcast %4 : vector<1x128xf32> to vector<8x128xf32>
    %7 = arith.mulf %5, %6 : vector<8x128xf32>
    %8 = vector.extract_strided_slice %2 {offsets = [0, 1], sizes = [8, 1], strides = [1, 1]} : vector<8x8xf32> to vector<8x1xf32>
    %9 = vector.extract_strided_slice %0 {offsets = [1, 0], sizes = [1, 128], strides = [1, 1]} : vector<8x128xf32> to vector<1x128xf32>
    %10 = vector.broadcast %8 : vector<8x1xf32> to vector<8x128xf32>
    %11 = vector.broadcast %9 : vector<1x128xf32> to vector<8x128xf32>
    %12 = arith.mulf %10, %11 : vector<8x128xf32>
    %13 = arith.addf %7, %12 : vector<8x128xf32>
    %14 = vector.extract_strided_slice %2 {offsets = [0, 2], sizes = [8, 1], strides = [1, 1]} : vector<8x8xf32> to vector<8x1xf32>
    %15 = vector.extract_strided_slice %0 {offsets = [2, 0], sizes = [1, 128], strides = [1, 1]} : vector<8x128xf32> to vector<1x128xf32>
    %16 = vector.broadcast %14 : vector<8x1xf32> to vector<8x128xf32>
    %17 = vector.broadcast %15 : vector<1x128xf32> to vector<8x128xf32>
    %18 = arith.mulf %16, %17 : vector<8x128xf32>
    %19 = arith.addf %13, %18 : vector<8x128xf32>
    %20 = vector.extract_strided_slice %2 {offsets = [0, 3], sizes = [8, 1], strides = [1, 1]} : vector<8x8xf32> to vector<8x1xf32>
    %21 = vector.extract_strided_slice %0 {offsets = [3, 0], sizes = [1, 128], strides = [1, 1]} : vector<8x128xf32> to vector<1x128xf32>
    %22 = vector.broadcast %20 : vector<8x1xf32> to vector<8x128xf32>
    %23 = vector.broadcast %21 : vector<1x128xf32> to vector<8x128xf32>
    %24 = arith.mulf %22, %23 : vector<8x128xf32>
    %25 = arith.addf %19, %24 : vector<8x128xf32>
    %26 = vector.extract_strided_slice %2 {offsets = [0, 4], sizes = [8, 1], strides = [1, 1]} : vector<8x8xf32> to vector<8x1xf32>
    %27 = vector.extract_strided_slice %0 {offsets = [4, 0], sizes = [1, 128], strides = [1, 1]} : vector<8x128xf32> to vector<1x128xf32>
    %28 = vector.broadcast %26 : vector<8x1xf32> to vector<8x128xf32>
    %29 = vector.broadcast %27 : vector<1x128xf32> to vector<8x128xf32>
    %30 = arith.mulf %28, %29 : vector<8x128xf32>
    %31 = arith.addf %25, %30 : vector<8x128xf32>
    %32 = vector.extract_strided_slice %2 {offsets = [0, 5], sizes = [8, 1], strides = [1, 1]} : vector<8x8xf32> to vector<8x1xf32>
    %33 = vector.extract_strided_slice %0 {offsets = [5, 0], sizes = [1, 128], strides = [1, 1]} : vector<8x128xf32> to vector<1x128xf32>
    %34 = vector.broadcast %32 : vector<8x1xf32> to vector<8x128xf32>
    %35 = vector.broadcast %33 : vector<1x128xf32> to vector<8x128xf32>
    %36 = arith.mulf %34, %35 : vector<8x128xf32>
    %37 = arith.addf %31, %36 : vector<8x128xf32>
    %38 = vector.extract_strided_slice %2 {offsets = [0, 6], sizes = [8, 1], strides = [1, 1]} : vector<8x8xf32> to vector<8x1xf32>
    %39 = vector.extract_strided_slice %0 {offsets = [6, 0], sizes = [1, 128], strides = [1, 1]} : vector<8x128xf32> to vector<1x128xf32>
    %40 = vector.broadcast %38 : vector<8x1xf32> to vector<8x128xf32>
    %41 = vector.broadcast %39 : vector<1x128xf32> to vector<8x128xf32>
    %42 = arith.mulf %40, %41 : vector<8x128xf32>
    %43 = arith.addf %37, %42 : vector<8x128xf32>
    %44 = vector.extract_strided_slice %2 {offsets = [0, 7], sizes = [8, 1], strides = [1, 1]} : vector<8x8xf32> to vector<8x1xf32>
    %45 = vector.extract_strided_slice %0 {offsets = [7, 0], sizes = [1, 128], strides = [1, 1]} : vector<8x128xf32> to vector<1x128xf32>
    %46 = vector.broadcast %44 : vector<8x1xf32> to vector<8x128xf32>
    %47 = vector.broadcast %45 : vector<1x128xf32> to vector<8x128xf32>
    %48 = arith.mulf %46, %47 : vector<8x128xf32>
    %49 = arith.addf %43, %48 : vector<8x128xf32>
    %cst = arith.constant 0.000000e+00 : f32
    %50 = vector.broadcast %cst : f32 to vector<8x128xf32>
    %51 = arith.maximumf %49, %50 : vector<8x128xf32>
    %c1 = arith.constant 1 : index
    %c0_4 = arith.constant 0 : index
    %c0_5 = arith.constant 0 : index
    %52 = vector.load %arg2[%c1, %c0_4, %c0_5] : memref<5x8x8xf32, #tpu.memory_space<vmem>>, vector<1x8x8xf32>
    %53 = vector.shape_cast %52 : vector<1x8x8xf32> to vector<8x8xf32>
    %54 = vector.extract_strided_slice %53 {offsets = [0, 0], sizes = [8, 1], strides = [1, 1]} : vector<8x8xf32> to vector<8x1xf32>
    %55 = vector.extract_strided_slice %51 {offsets = [0, 0], sizes = [1, 128], strides = [1, 1]} : vector<8x128xf32> to vector<1x128xf32>
    %56 = vector.broadcast %54 : vector<8x1xf32> to vector<8x128xf32>
    %57 = vector.broadcast %55 : vector<1x128xf32> to vector<8x128xf32>
    %58 = arith.mulf %56, %57 : vector<8x128xf32>
    %59 = vector.extract_strided_slice %53 {offsets = [0, 1], sizes = [8, 1], strides = [1, 1]} : vector<8x8xf32> to vector<8x1xf32>
    %60 = vector.extract_strided_slice %51 {offsets = [1, 0], sizes = [1, 128], strides = [1, 1]} : vector<8x128xf32> to vector<1x128xf32>
    %61 = vector.broadcast %59 : vector<8x1xf32> to vector<8x128xf32>
    %62 = vector.broadcast %60 : vector<1x128xf32> to vector<8x128xf32>
    %63 = arith.mulf %61, %62 : vector<8x128xf32>
    %64 = arith.addf %58, %63 : vector<8x128xf32>
    %65 = vector.extract_strided_slice %53 {offsets = [0, 2], sizes = [8, 1], strides = [1, 1]} : vector<8x8xf32> to vector<8x1xf32>
    %66 = vector.extract_strided_slice %51 {offsets = [2, 0], sizes = [1, 128], strides = [1, 1]} : vector<8x128xf32> to vector<1x128xf32>
    %67 = vector.broadcast %65 : vector<8x1xf32> to vector<8x128xf32>
    %68 = vector.broadcast %66 : vector<1x128xf32> to vector<8x128xf32>
    %69 = arith.mulf %67, %68 : vector<8x128xf32>
    %70 = arith.addf %64, %69 : vector<8x128xf32>
    %71 = vector.extract_strided_slice %53 {offsets = [0, 3], sizes = [8, 1], strides = [1, 1]} : vector<8x8xf32> to vector<8x1xf32>
    %72 = vector.extract_strided_slice %51 {offsets = [3, 0], sizes = [1, 128], strides = [1, 1]} : vector<8x128xf32> to vector<1x128xf32>
    %73 = vector.broadcast %71 : vector<8x1xf32> to vector<8x128xf32>
    %74 = vector.broadcast %72 : vector<1x128xf32> to vector<8x128xf32>
    %75 = arith.mulf %73, %74 : vector<8x128xf32>
    %76 = arith.addf %70, %75 : vector<8x128xf32>
    %77 = vector.extract_strided_slice %53 {offsets = [0, 4], sizes = [8, 1], strides = [1, 1]} : vector<8x8xf32> to vector<8x1xf32>
    %78 = vector.extract_strided_slice %51 {offsets = [4, 0], sizes = [1, 128], strides = [1, 1]} : vector<8x128xf32> to vector<1x128xf32>
    %79 = vector.broadcast %77 : vector<8x1xf32> to vector<8x128xf32>
    %80 = vector.broadcast %78 : vector<1x128xf32> to vector<8x128xf32>
    %81 = arith.mulf %79, %80 : vector<8x128xf32>
    %82 = arith.addf %76, %81 : vector<8x128xf32>
    %83 = vector.extract_strided_slice %53 {offsets = [0, 5], sizes = [8, 1], strides = [1, 1]} : vector<8x8xf32> to vector<8x1xf32>
    %84 = vector.extract_strided_slice %51 {offsets = [5, 0], sizes = [1, 128], strides = [1, 1]} : vector<8x128xf32> to vector<1x128xf32>
    %85 = vector.broadcast %83 : vector<8x1xf32> to vector<8x128xf32>
    %86 = vector.broadcast %84 : vector<1x128xf32> to vector<8x128xf32>
    %87 = arith.mulf %85, %86 : vector<8x128xf32>
    %88 = arith.addf %82, %87 : vector<8x128xf32>
    %89 = vector.extract_strided_slice %53 {offsets = [0, 6], sizes = [8, 1], strides = [1, 1]} : vector<8x8xf32> to vector<8x1xf32>
    %90 = vector.extract_strided_slice %51 {offsets = [6, 0], sizes = [1, 128], strides = [1, 1]} : vector<8x128xf32> to vector<1x128xf32>
    %91 = vector.broadcast %89 : vector<8x1xf32> to vector<8x128xf32>
    %92 = vector.broadcast %90 : vector<1x128xf32> to vector<8x128xf32>
    %93 = arith.mulf %91, %92 : vector<8x128xf32>
    %94 = arith.addf %88, %93 : vector<8x128xf32>
    %95 = vector.extract_strided_slice %53 {offsets = [0, 7], sizes = [8, 1], strides = [1, 1]} : vector<8x8xf32> to vector<8x1xf32>
    %96 = vector.extract_strided_slice %51 {offsets = [7, 0], sizes = [1, 128], strides = [1, 1]} : vector<8x128xf32> to vector<1x128xf32>
    %97 = vector.broadcast %95 : vector<8x1xf32> to vector<8x128xf32>
    %98 = vector.broadcast %96 : vector<1x128xf32> to vector<8x128xf32>
    %99 = arith.mulf %97, %98 : vector<8x128xf32>
    %100 = arith.addf %94, %99 : vector<8x128xf32>
    %cst_6 = arith.constant 0.000000e+00 : f32
    %101 = vector.broadcast %cst_6 : f32 to vector<8x128xf32>
    %102 = arith.maximumf %100, %101 : vector<8x128xf32>
    %c2 = arith.constant 2 : index
    %c0_7 = arith.constant 0 : index
    %c0_8 = arith.constant 0 : index
    %103 = vector.load %arg2[%c2, %c0_7, %c0_8] : memref<5x8x8xf32, #tpu.memory_space<vmem>>, vector<1x8x8xf32>
    %104 = vector.shape_cast %103 : vector<1x8x8xf32> to vector<8x8xf32>
    %105 = vector.extract_strided_slice %104 {offsets = [0, 0], sizes = [8, 1], strides = [1, 1]} : vector<8x8xf32> to vector<8x1xf32>
    %106 = vector.extract_strided_slice %102 {offsets = [0, 0], sizes = [1, 128], strides = [1, 1]} : vector<8x128xf32> to vector<1x128xf32>
    %107 = vector.broadcast %105 : vector<8x1xf32> to vector<8x128xf32>
    %108 = vector.broadcast %106 : vector<1x128xf32> to vector<8x128xf32>
    %109 = arith.mulf %107, %108 : vector<8x128xf32>
    %110 = vector.extract_strided_slice %104 {offsets = [0, 1], sizes = [8, 1], strides = [1, 1]} : vector<8x8xf32> to vector<8x1xf32>
    %111 = vector.extract_strided_slice %102 {offsets = [1, 0], sizes = [1, 128], strides = [1, 1]} : vector<8x128xf32> to vector<1x128xf32>
    %112 = vector.broadcast %110 : vector<8x1xf32> to vector<8x128xf32>
    %113 = vector.broadcast %111 : vector<1x128xf32> to vector<8x128xf32>
    %114 = arith.mulf %112, %113 : vector<8x128xf32>
    %115 = arith.addf %109, %114 : vector<8x128xf32>
    %116 = vector.extract_strided_slice %104 {offsets = [0, 2], sizes = [8, 1], strides = [1, 1]} : vector<8x8xf32> to vector<8x1xf32>
    %117 = vector.extract_strided_slice %102 {offsets = [2, 0], sizes = [1, 128], strides = [1, 1]} : vector<8x128xf32> to vector<1x128xf32>
    %118 = vector.broadcast %116 : vector<8x1xf32> to vector<8x128xf32>
    %119 = vector.broadcast %117 : vector<1x128xf32> to vector<8x128xf32>
    %120 = arith.mulf %118, %119 : vector<8x128xf32>
    %121 = arith.addf %115, %120 : vector<8x128xf32>
    %122 = vector.extract_strided_slice %104 {offsets = [0, 3], sizes = [8, 1], strides = [1, 1]} : vector<8x8xf32> to vector<8x1xf32>
    %123 = vector.extract_strided_slice %102 {offsets = [3, 0], sizes = [1, 128], strides = [1, 1]} : vector<8x128xf32> to vector<1x128xf32>
    %124 = vector.broadcast %122 : vector<8x1xf32> to vector<8x128xf32>
    %125 = vector.broadcast %123 : vector<1x128xf32> to vector<8x128xf32>
    %126 = arith.mulf %124, %125 : vector<8x128xf32>
    %127 = arith.addf %121, %126 : vector<8x128xf32>
    %128 = vector.extract_strided_slice %104 {offsets = [0, 4], sizes = [8, 1], strides = [1, 1]} : vector<8x8xf32> to vector<8x1xf32>
    %129 = vector.extract_strided_slice %102 {offsets = [4, 0], sizes = [1, 128], strides = [1, 1]} : vector<8x128xf32> to vector<1x128xf32>
    %130 = vector.broadcast %128 : vector<8x1xf32> to vector<8x128xf32>
    %131 = vector.broadcast %129 : vector<1x128xf32> to vector<8x128xf32>
    %132 = arith.mulf %130, %131 : vector<8x128xf32>
    %133 = arith.addf %127, %132 : vector<8x128xf32>
    %134 = vector.extract_strided_slice %104 {offsets = [0, 5], sizes = [8, 1], strides = [1, 1]} : vector<8x8xf32> to vector<8x1xf32>
    %135 = vector.extract_strided_slice %102 {offsets = [5, 0], sizes = [1, 128], strides = [1, 1]} : vector<8x128xf32> to vector<1x128xf32>
    %136 = vector.broadcast %134 : vector<8x1xf32> to vector<8x128xf32>
    %137 = vector.broadcast %135 : vector<1x128xf32> to vector<8x128xf32>
    %138 = arith.mulf %136, %137 : vector<8x128xf32>
    %139 = arith.addf %133, %138 : vector<8x128xf32>
    %140 = vector.extract_strided_slice %104 {offsets = [0, 6], sizes = [8, 1], strides = [1, 1]} : vector<8x8xf32> to vector<8x1xf32>
    %141 = vector.extract_strided_slice %102 {offsets = [6, 0], sizes = [1, 128], strides = [1, 1]} : vector<8x128xf32> to vector<1x128xf32>
    %142 = vector.broadcast %140 : vector<8x1xf32> to vector<8x128xf32>
    %143 = vector.broadcast %141 : vector<1x128xf32> to vector<8x128xf32>
    %144 = arith.mulf %142, %143 : vector<8x128xf32>
    %145 = arith.addf %139, %144 : vector<8x128xf32>
    %146 = vector.extract_strided_slice %104 {offsets = [0, 7], sizes = [8, 1], strides = [1, 1]} : vector<8x8xf32> to vector<8x1xf32>
    %147 = vector.extract_strided_slice %102 {offsets = [7, 0], sizes = [1, 128], strides = [1, 1]} : vector<8x128xf32> to vector<1x128xf32>
    %148 = vector.broadcast %146 : vector<8x1xf32> to vector<8x128xf32>
    %149 = vector.broadcast %147 : vector<1x128xf32> to vector<8x128xf32>
    %150 = arith.mulf %148, %149 : vector<8x128xf32>
    %151 = arith.addf %145, %150 : vector<8x128xf32>
    %cst_9 = arith.constant 0.000000e+00 : f32
    %152 = vector.broadcast %cst_9 : f32 to vector<8x128xf32>
    %153 = arith.maximumf %151, %152 : vector<8x128xf32>
    %c3 = arith.constant 3 : index
    %c0_10 = arith.constant 0 : index
    %c0_11 = arith.constant 0 : index
    %154 = vector.load %arg2[%c3, %c0_10, %c0_11] : memref<5x8x8xf32, #tpu.memory_space<vmem>>, vector<1x8x8xf32>
    %155 = vector.shape_cast %154 : vector<1x8x8xf32> to vector<8x8xf32>
    %156 = vector.extract_strided_slice %155 {offsets = [0, 0], sizes = [8, 1], strides = [1, 1]} : vector<8x8xf32> to vector<8x1xf32>
    %157 = vector.extract_strided_slice %153 {offsets = [0, 0], sizes = [1, 128], strides = [1, 1]} : vector<8x128xf32> to vector<1x128xf32>
    %158 = vector.broadcast %156 : vector<8x1xf32> to vector<8x128xf32>
    %159 = vector.broadcast %157 : vector<1x128xf32> to vector<8x128xf32>
    %160 = arith.mulf %158, %159 : vector<8x128xf32>
    %161 = vector.extract_strided_slice %155 {offsets = [0, 1], sizes = [8, 1], strides = [1, 1]} : vector<8x8xf32> to vector<8x1xf32>
    %162 = vector.extract_strided_slice %153 {offsets = [1, 0], sizes = [1, 128], strides = [1, 1]} : vector<8x128xf32> to vector<1x128xf32>
    %163 = vector.broadcast %161 : vector<8x1xf32> to vector<8x128xf32>
    %164 = vector.broadcast %162 : vector<1x128xf32> to vector<8x128xf32>
    %165 = arith.mulf %163, %164 : vector<8x128xf32>
    %166 = arith.addf %160, %165 : vector<8x128xf32>
    %167 = vector.extract_strided_slice %155 {offsets = [0, 2], sizes = [8, 1], strides = [1, 1]} : vector<8x8xf32> to vector<8x1xf32>
    %168 = vector.extract_strided_slice %153 {offsets = [2, 0], sizes = [1, 128], strides = [1, 1]} : vector<8x128xf32> to vector<1x128xf32>
    %169 = vector.broadcast %167 : vector<8x1xf32> to vector<8x128xf32>
    %170 = vector.broadcast %168 : vector<1x128xf32> to vector<8x128xf32>
    %171 = arith.mulf %169, %170 : vector<8x128xf32>
    %172 = arith.addf %166, %171 : vector<8x128xf32>
    %173 = vector.extract_strided_slice %155 {offsets = [0, 3], sizes = [8, 1], strides = [1, 1]} : vector<8x8xf32> to vector<8x1xf32>
    %174 = vector.extract_strided_slice %153 {offsets = [3, 0], sizes = [1, 128], strides = [1, 1]} : vector<8x128xf32> to vector<1x128xf32>
    %175 = vector.broadcast %173 : vector<8x1xf32> to vector<8x128xf32>
    %176 = vector.broadcast %174 : vector<1x128xf32> to vector<8x128xf32>
    %177 = arith.mulf %175, %176 : vector<8x128xf32>
    %178 = arith.addf %172, %177 : vector<8x128xf32>
    %179 = vector.extract_strided_slice %155 {offsets = [0, 4], sizes = [8, 1], strides = [1, 1]} : vector<8x8xf32> to vector<8x1xf32>
    %180 = vector.extract_strided_slice %153 {offsets = [4, 0], sizes = [1, 128], strides = [1, 1]} : vector<8x128xf32> to vector<1x128xf32>
    %181 = vector.broadcast %179 : vector<8x1xf32> to vector<8x128xf32>
    %182 = vector.broadcast %180 : vector<1x128xf32> to vector<8x128xf32>
    %183 = arith.mulf %181, %182 : vector<8x128xf32>
    %184 = arith.addf %178, %183 : vector<8x128xf32>
    %185 = vector.extract_strided_slice %155 {offsets = [0, 5], sizes = [8, 1], strides = [1, 1]} : vector<8x8xf32> to vector<8x1xf32>
    %186 = vector.extract_strided_slice %153 {offsets = [5, 0], sizes = [1, 128], strides = [1, 1]} : vector<8x128xf32> to vector<1x128xf32>
    %187 = vector.broadcast %185 : vector<8x1xf32> to vector<8x128xf32>
    %188 = vector.broadcast %186 : vector<1x128xf32> to vector<8x128xf32>
    %189 = arith.mulf %187, %188 : vector<8x128xf32>
    %190 = arith.addf %184, %189 : vector<8x128xf32>
    %191 = vector.extract_strided_slice %155 {offsets = [0, 6], sizes = [8, 1], strides = [1, 1]} : vector<8x8xf32> to vector<8x1xf32>
    %192 = vector.extract_strided_slice %153 {offsets = [6, 0], sizes = [1, 128], strides = [1, 1]} : vector<8x128xf32> to vector<1x128xf32>
    %193 = vector.broadcast %191 : vector<8x1xf32> to vector<8x128xf32>
    %194 = vector.broadcast %192 : vector<1x128xf32> to vector<8x128xf32>
    %195 = arith.mulf %193, %194 : vector<8x128xf32>
    %196 = arith.addf %190, %195 : vector<8x128xf32>
    %197 = vector.extract_strided_slice %155 {offsets = [0, 7], sizes = [8, 1], strides = [1, 1]} : vector<8x8xf32> to vector<8x1xf32>
    %198 = vector.extract_strided_slice %153 {offsets = [7, 0], sizes = [1, 128], strides = [1, 1]} : vector<8x128xf32> to vector<1x128xf32>
    %199 = vector.broadcast %197 : vector<8x1xf32> to vector<8x128xf32>
    %200 = vector.broadcast %198 : vector<1x128xf32> to vector<8x128xf32>
    %201 = arith.mulf %199, %200 : vector<8x128xf32>
    %202 = arith.addf %196, %201 : vector<8x128xf32>
    %cst_12 = arith.constant 0.000000e+00 : f32
    %203 = vector.broadcast %cst_12 : f32 to vector<8x128xf32>
    %204 = arith.maximumf %202, %203 : vector<8x128xf32>
    %c4 = arith.constant 4 : index
    %c0_13 = arith.constant 0 : index
    %c0_14 = arith.constant 0 : index
    %205 = vector.load %arg2[%c4, %c0_13, %c0_14] : memref<5x8x8xf32, #tpu.memory_space<vmem>>, vector<1x8x8xf32>
    %206 = vector.shape_cast %205 : vector<1x8x8xf32> to vector<8x8xf32>
    %207 = vector.extract_strided_slice %206 {offsets = [0, 0], sizes = [8, 1], strides = [1, 1]} : vector<8x8xf32> to vector<8x1xf32>
    %208 = vector.extract_strided_slice %204 {offsets = [0, 0], sizes = [1, 128], strides = [1, 1]} : vector<8x128xf32> to vector<1x128xf32>
    %209 = vector.broadcast %207 : vector<8x1xf32> to vector<8x128xf32>
    %210 = vector.broadcast %208 : vector<1x128xf32> to vector<8x128xf32>
    %211 = arith.mulf %209, %210 : vector<8x128xf32>
    %212 = vector.extract_strided_slice %206 {offsets = [0, 1], sizes = [8, 1], strides = [1, 1]} : vector<8x8xf32> to vector<8x1xf32>
    %213 = vector.extract_strided_slice %204 {offsets = [1, 0], sizes = [1, 128], strides = [1, 1]} : vector<8x128xf32> to vector<1x128xf32>
    %214 = vector.broadcast %212 : vector<8x1xf32> to vector<8x128xf32>
    %215 = vector.broadcast %213 : vector<1x128xf32> to vector<8x128xf32>
    %216 = arith.mulf %214, %215 : vector<8x128xf32>
    %217 = arith.addf %211, %216 : vector<8x128xf32>
    %218 = vector.extract_strided_slice %206 {offsets = [0, 2], sizes = [8, 1], strides = [1, 1]} : vector<8x8xf32> to vector<8x1xf32>
    %219 = vector.extract_strided_slice %204 {offsets = [2, 0], sizes = [1, 128], strides = [1, 1]} : vector<8x128xf32> to vector<1x128xf32>
    %220 = vector.broadcast %218 : vector<8x1xf32> to vector<8x128xf32>
    %221 = vector.broadcast %219 : vector<1x128xf32> to vector<8x128xf32>
    %222 = arith.mulf %220, %221 : vector<8x128xf32>
    %223 = arith.addf %217, %222 : vector<8x128xf32>
    %224 = vector.extract_strided_slice %206 {offsets = [0, 3], sizes = [8, 1], strides = [1, 1]} : vector<8x8xf32> to vector<8x1xf32>
    %225 = vector.extract_strided_slice %204 {offsets = [3, 0], sizes = [1, 128], strides = [1, 1]} : vector<8x128xf32> to vector<1x128xf32>
    %226 = vector.broadcast %224 : vector<8x1xf32> to vector<8x128xf32>
    %227 = vector.broadcast %225 : vector<1x128xf32> to vector<8x128xf32>
    %228 = arith.mulf %226, %227 : vector<8x128xf32>
    %229 = arith.addf %223, %228 : vector<8x128xf32>
    %230 = vector.extract_strided_slice %206 {offsets = [0, 4], sizes = [8, 1], strides = [1, 1]} : vector<8x8xf32> to vector<8x1xf32>
    %231 = vector.extract_strided_slice %204 {offsets = [4, 0], sizes = [1, 128], strides = [1, 1]} : vector<8x128xf32> to vector<1x128xf32>
    %232 = vector.broadcast %230 : vector<8x1xf32> to vector<8x128xf32>
    %233 = vector.broadcast %231 : vector<1x128xf32> to vector<8x128xf32>
    %234 = arith.mulf %232, %233 : vector<8x128xf32>
    %235 = arith.addf %229, %234 : vector<8x128xf32>
    %236 = vector.extract_strided_slice %206 {offsets = [0, 5], sizes = [8, 1], strides = [1, 1]} : vector<8x8xf32> to vector<8x1xf32>
    %237 = vector.extract_strided_slice %204 {offsets = [5, 0], sizes = [1, 128], strides = [1, 1]} : vector<8x128xf32> to vector<1x128xf32>
    %238 = vector.broadcast %236 : vector<8x1xf32> to vector<8x128xf32>
    %239 = vector.broadcast %237 : vector<1x128xf32> to vector<8x128xf32>
    %240 = arith.mulf %238, %239 : vector<8x128xf32>
    %241 = arith.addf %235, %240 : vector<8x128xf32>
    %242 = vector.extract_strided_slice %206 {offsets = [0, 6], sizes = [8, 1], strides = [1, 1]} : vector<8x8xf32> to vector<8x1xf32>
    %243 = vector.extract_strided_slice %204 {offsets = [6, 0], sizes = [1, 128], strides = [1, 1]} : vector<8x128xf32> to vector<1x128xf32>
    %244 = vector.broadcast %242 : vector<8x1xf32> to vector<8x128xf32>
    %245 = vector.broadcast %243 : vector<1x128xf32> to vector<8x128xf32>
    %246 = arith.mulf %244, %245 : vector<8x128xf32>
    %247 = arith.addf %241, %246 : vector<8x128xf32>
    %248 = vector.extract_strided_slice %206 {offsets = [0, 7], sizes = [8, 1], strides = [1, 1]} : vector<8x8xf32> to vector<8x1xf32>
    %249 = vector.extract_strided_slice %204 {offsets = [7, 0], sizes = [1, 128], strides = [1, 1]} : vector<8x128xf32> to vector<1x128xf32>
    %250 = vector.broadcast %248 : vector<8x1xf32> to vector<8x128xf32>
    %251 = vector.broadcast %249 : vector<1x128xf32> to vector<8x128xf32>
    %252 = arith.mulf %250, %251 : vector<8x128xf32>
    %253 = arith.addf %247, %252 : vector<8x128xf32>
    %254 = vector.extract_strided_slice %253 {offsets = [0, 0], sizes = [1, 128], strides = [1, 1]} : vector<8x128xf32> to vector<1x128xf32>
    %255 = vector.extract_strided_slice %253 {offsets = [1, 0], sizes = [1, 128], strides = [1, 1]} : vector<8x128xf32> to vector<1x128xf32>
    %256 = arith.subf %254, %255 : vector<1x128xf32>
    %257 = math.exp %256 : vector<1x128xf32>
    %cst_15 = arith.constant 1.000000e+00 : f32
    %258 = vector.broadcast %cst_15 : f32 to vector<1x128xf32>
    %259 = arith.addf %258, %257 : vector<1x128xf32>
    %cst_16 = arith.constant 1.000000e+00 : f32
    %260 = vector.broadcast %cst_16 : f32 to vector<1x128xf32>
    %261 = arith.divf %260, %259 : vector<1x128xf32>
    %cst_17 = arith.constant 1.000000e+00 : f32
    %262 = vector.broadcast %cst_17 : f32 to vector<1x128xf32>
    %263 = arith.subf %262, %261 : vector<1x128xf32>
    %cst_18 = arith.constant 0.000000e+00 : f32
    %264 = vector.broadcast %cst_18 : f32 to vector<8x128xf32>
    %c0_19 = arith.constant 0 : index
    %c0_20 = arith.constant 0 : index
    %265 = vector.load %arg3[%c0_19, %c0_20] : memref<8x128xf32, #tpu.memory_space<vmem>>, vector<8x128xf32>
    tpu.vector_store %arg3[%c0_19, %c0_20], %264 {strides = array<i32>} : memref<8x128xf32, #tpu.memory_space<vmem>>, vector<8x128xf32>,
    %c0_21 = arith.constant 0 : index
    %c0_22 = arith.constant 0 : index
    %266 = vector.load %arg3[%c0_21, %c0_22] : memref<8x128xf32, #tpu.memory_space<vmem>>, vector<1x128xf32>
    tpu.vector_store %arg3[%c0_21, %c0_22], %263 {strides = array<i32>} : memref<8x128xf32, #tpu.memory_space<vmem>>, vector<1x128xf32>,
    %c1_23 = arith.constant 1 : index
    %c0_24 = arith.constant 0 : index
    %267 = vector.load %arg3[%c1_23, %c0_24] : memref<8x128xf32, #tpu.memory_space<vmem>>, vector<1x128xf32>
    tpu.vector_store %arg3[%c1_23, %c0_24], %261 {strides = array<i32>} : memref<8x128xf32, #tpu.memory_space<vmem>>, vector<1x128xf32>,
    return
  }
  func.func @transform_0(%arg0: i32) -> (i32, i32) {
    %c0_i32 = arith.constant 0 : i32
    %c0_i32_0 = arith.constant 0 : i32
    return %c0_i32, %arg0 : i32, i32
  }
  func.func @transform_1(%arg0: i32) -> (i32, i32, i32) {
    %c0_i32 = arith.constant 0 : i32
    %c0_i32_0 = arith.constant 0 : i32
    %c0_i32_1 = arith.constant 0 : i32
    %c0_i32_2 = arith.constant 0 : i32
    return %c0_i32, %c0_i32_0, %c0_i32_1 : i32, i32, i32
  }
  func.func @transform_2(%arg0: i32) -> (i32, i32) {
    %c0_i32 = arith.constant 0 : i32
    %c0_i32_0 = arith.constant 0 : i32
    return %c0_i32, %arg0 : i32, i32
  }
}

</mosaic_0001>

<llo_original>
// kernel: titanic_forward.1
$region0: #{titanic_forward.1}
  #allocation0 [shape = 'u32[]', space=smem, size = 0x4, offset = 0x4, fixed_abs, tag = 'smem constant byte address 0x4 - core index']
  #allocation1 [shape = 'u32[144,128]{1,0:T(1,128)}', space=vmem, size = 0x12000, scoped, tag = 'internal scratch']
  %s0 = inlined_call_operand.vmem [shape: f32[8,128], index: 0, kind: input, shape index: {}]
  %s1 = inlined_call_operand.vmem [shape: f32[5,8,8], index: 1, kind: input, shape index: {}]
  %s2 = inlined_call_operand.vmem [shape: f32[8,128], index: 2, kind: output, shape index: {}]
  %s3 = sld [smem:[#allocation0]]
  $region18: #{titanic_forward.1} parent=0
    _
  %s5 = ssub.s32 1, %s3
  %s6 = scalar_select 0, %s5, %s3
  // Predicated region
  $region2: #{titanic_forward.1} parent=0 // pred_check
    _
  $region3: #{titanic_forward.1} parent=0 // pred_check_branch
    %8 = sbr.rel (0) target = $region5
  $region4: #{titanic_forward.1} parent=0 // pred_region
    _
  $region5: #{titanic_forward.1} parent=0 // pred_fallthru
    _
  // Predicated region
  $region6: #{titanic_forward.1} parent=0 // pred_check
    _
  $region7: #{titanic_forward.1} parent=0 // pred_check_branch
    %10 = sbr.rel (0) target = $region9
  $region8: #{titanic_forward.1} parent=0 // pred_region
    _
  $region9: #{titanic_forward.1} parent=0 // pred_fallthru
    _
  %v11 = vld [vmem:[%s0] sm:$0xff]
  %v12 = vld [vmem:[%s1] sm:$0xff]
  %14 = vset.pattern.permute.xlu0 0
  %15 = vperm.xlu0 %14, %v12
  %v16 = vpop.permute.xlu0 %15
  %v18 = vlaneseq
  %v19 = vshrl.u32 %v18, 7
  %v20 = vsub.s32 0, %v19
  %v21 = vrot.slane %v11, %v20
  %v22 = vmul.f32 %v16, %v21
  %23 = vset.pattern.permute.xlu0 1
  %24 = vperm.xlu0 %23, %v12
  %v25 = vpop.permute.xlu0 %24
  %v27 = vlaneseq
  %v28 = vshrl.u32 %v27, 7
  %v29 = vsub.s32 1, %v28
  %v30 = vrot.slane %v11, %v29
  %v31 = vmul.f32 %v25, %v30
  %v32 = vadd.f32 %v22, %v31
  %33 = vset.pattern.permute.xlu0 2
  %34 = vperm.xlu0 %33, %v12
  %v35 = vpop.permute.xlu0 %34
  %v37 = vlaneseq
  %v38 = vshrl.u32 %v37, 7
  %v39 = vsub.s32 2, %v38
  %v40 = vrot.slane %v11, %v39
  %v41 = vmul.f32 %v35, %v40
  %v42 = vadd.f32 %v32, %v41
  %43 = vset.pattern.permute.xlu0 3
  %44 = vperm.xlu0 %43, %v12
  %v45 = vpop.permute.xlu0 %44
  %v47 = vlaneseq
  %v48 = vshrl.u32 %v47, 7
  %v49 = vsub.s32 3, %v48
  %v50 = vrot.slane %v11, %v49
  %v51 = vmul.f32 %v45, %v50
  %v52 = vadd.f32 %v42, %v51
  %53 = vset.pattern.permute.xlu0 4
  %54 = vperm.xlu0 %53, %v12
  %v55 = vpop.permute.xlu0 %54
  %v57 = vlaneseq
  %v58 = vshrl.u32 %v57, 7
  %v59 = vsub.s32 4, %v58
  %v60 = vrot.slane %v11, %v59
  %v61 = vmul.f32 %v55, %v60
  %v62 = vadd.f32 %v52, %v61
  %63 = vset.pattern.permute.xlu0 5
  %64 = vperm.xlu0 %63, %v12
  %v65 = vpop.permute.xlu0 %64
  %v67 = vlaneseq
  %v68 = vshrl.u32 %v67, 7
  %v69 = vsub.s32 5, %v68
  %v70 = vrot.slane %v11, %v69
  %v71 = vmul.f32 %v65, %v70
  %v72 = vadd.f32 %v62, %v71
  %73 = vset.pattern.permute.xlu0 6
  %74 = vperm.xlu0 %73, %v12
  %v75 = vpop.permute.xlu0 %74
  %v77 = vlaneseq
  %v78 = vshrl.u32 %v77, 7
  %v79 = vsub.s32 6, %v78
  %v80 = vrot.slane %v11, %v79
  %v81 = vmul.f32 %v75, %v80
  %v82 = vadd.f32 %v72, %v81
  %83 = vset.pattern.permute.xlu0 7
  %84 = vperm.xlu0 %83, %v12
  %v85 = vpop.permute.xlu0 %84
  %v87 = vlaneseq
  %v88 = vshrl.u32 %v87, 7
  %v89 = vsub.s32 7, %v88
  %v90 = vrot.slane %v11, %v89
  %v91 = vmul.f32 %v85, %v90
  %v92 = vadd.f32 %v82, %v91
  %v93 = vmax.f32 %v92, 0.0
  %s94 = scalar_lea.vmem %s1, 8
  %v95 = vld [vmem:[%s94] sm:$0xff]
  %97 = vset.pattern.permute.xlu0 0
  %98 = vperm.xlu0 %97, %v95
  %v99 = vpop.permute.xlu0 %98
  %v101 = vlaneseq
  %v102 = vshrl.u32 %v101, 7
  %v103 = vsub.s32 0, %v102
  %v104 = vrot.slane %v93, %v103
  %v105 = vmul.f32 %v99, %v104
  %106 = vset.pattern.permute.xlu0 1
  %107 = vperm.xlu0 %106, %v95
  %v108 = vpop.permute.xlu0 %107
  %v110 = vlaneseq
  %v111 = vshrl.u32 %v110, 7
  %v112 = vsub.s32 1, %v111
  %v113 = vrot.slane %v93, %v112
  %v114 = vmul.f32 %v108, %v113
  %v115 = vadd.f32 %v105, %v114
  %116 = vset.pattern.permute.xlu0 2
  %117 = vperm.xlu0 %116, %v95
  %v118 = vpop.permute.xlu0 %117
  %v120 = vlaneseq
  %v121 = vshrl.u32 %v120, 7
  %v122 = vsub.s32 2, %v121
  %v123 = vrot.slane %v93, %v122
  %v124 = vmul.f32 %v118, %v123
  %v125 = vadd.f32 %v115, %v124
  %126 = vset.pattern.permute.xlu0 3
  %127 = vperm.xlu0 %126, %v95
  %v128 = vpop.permute.xlu0 %127
  %v130 = vlaneseq
  %v131 = vshrl.u32 %v130, 7
  %v132 = vsub.s32 3, %v131
  %v133 = vrot.slane %v93, %v132
  %v134 = vmul.f32 %v128, %v133
  %v135 = vadd.f32 %v125, %v134
  %136 = vset.pattern.permute.xlu0 4
  %137 = vperm.xlu0 %136, %v95
  %v138 = vpop.permute.xlu0 %137
  %v140 = vlaneseq
  %v141 = vshrl.u32 %v140, 7
  %v142 = vsub.s32 4, %v141
  %v143 = vrot.slane %v93, %v142
  %v144 = vmul.f32 %v138, %v143
  %v145 = vadd.f32 %v135, %v144
  %146 = vset.pattern.permute.xlu0 5
  %147 = vperm.xlu0 %146, %v95
  %v148 = vpop.permute.xlu0 %147
  %v150 = vlaneseq
  %v151 = vshrl.u32 %v150, 7
  %v152 = vsub.s32 5, %v151
  %v153 = vrot.slane %v93, %v152
  %v154 = vmul.f32 %v148, %v153
  %v155 = vadd.f32 %v145, %v154
  %156 = vset.pattern.permute.xlu0 6
  %157 = vperm.xlu0 %156, %v95
  %v158 = vpop.permute.xlu0 %157
  %v160 = vlaneseq
  %v161 = vshrl.u32 %v160, 7
  %v162 = vsub.s32 6, %v161
  %v163 = vrot.slane %v93, %v162
  %v164 = vmul.f32 %v158, %v163
  %v165 = vadd.f32 %v155, %v164
  %166 = vset.pattern.permute.xlu0 7
  %167 = vperm.xlu0 %166, %v95
  %v168 = vpop.permute.xlu0 %167
  %v170 = vlaneseq
  %v171 = vshrl.u32 %v170, 7
  %v172 = vsub.s32 7, %v171
  %v173 = vrot.slane %v93, %v172
  %v174 = vmul.f32 %v168, %v173
  %v175 = vadd.f32 %v165, %v174
  %v176 = vmax.f32 %v175, 0.0
  %s177 = scalar_lea.vmem %s1, 16
  %v178 = vld [vmem:[%s177] sm:$0xff]
  %180 = vset.pattern.permute.xlu0 0
  %181 = vperm.xlu0 %180, %v178
  %v182 = vpop.permute.xlu0 %181
  %v184 = vlaneseq
  %v185 = vshrl.u32 %v184, 7
  %v186 = vsub.s32 0, %v185
  %v187 = vrot.slane %v176, %v186
  %v188 = vmul.f32 %v182, %v187
  %189 = vset.pattern.permute.xlu0 1
  %190 = vperm.xlu0 %189, %v178
  %v191 = vpop.permute.xlu0 %190
  %v193 = vlaneseq
  %v194 = vshrl.u32 %v193, 7
  %v195 = vsub.s32 1, %v194
  %v196 = vrot.slane %v176, %v195
  %v197 = vmul.f32 %v191, %v196
  %v198 = vadd.f32 %v188, %v197
  %199 = vset.pattern.permute.xlu0 2
  %200 = vperm.xlu0 %199, %v178
  %v201 = vpop.permute.xlu0 %200
  %v203 = vlaneseq
  %v204 = vshrl.u32 %v203, 7
  %v205 = vsub.s32 2, %v204
  %v206 = vrot.slane %v176, %v205
  %v207 = vmul.f32 %v201, %v206
  %v208 = vadd.f32 %v198, %v207
  %209 = vset.pattern.permute.xlu0 3
  %210 = vperm.xlu0 %209, %v178
  %v211 = vpop.permute.xlu0 %210
  %v213 = vlaneseq
  %v214 = vshrl.u32 %v213, 7
  %v215 = vsub.s32 3, %v214
  %v216 = vrot.slane %v176, %v215
  %v217 = vmul.f32 %v211, %v216
  %v218 = vadd.f32 %v208, %v217
  %219 = vset.pattern.permute.xlu0 4
  %220 = vperm.xlu0 %219, %v178
  %v221 = vpop.permute.xlu0 %220
  %v223 = vlaneseq
  %v224 = vshrl.u32 %v223, 7
  %v225 = vsub.s32 4, %v224
  %v226 = vrot.slane %v176, %v225
  %v227 = vmul.f32 %v221, %v226
  %v228 = vadd.f32 %v218, %v227
  %229 = vset.pattern.permute.xlu0 5
  %230 = vperm.xlu0 %229, %v178
  %v231 = vpop.permute.xlu0 %230
  %v233 = vlaneseq
  %v234 = vshrl.u32 %v233, 7
  %v235 = vsub.s32 5, %v234
  %v236 = vrot.slane %v176, %v235
  %v237 = vmul.f32 %v231, %v236
  %v238 = vadd.f32 %v228, %v237
  %239 = vset.pattern.permute.xlu0 6
  %240 = vperm.xlu0 %239, %v178
  %v241 = vpop.permute.xlu0 %240
  %v243 = vlaneseq
  %v244 = vshrl.u32 %v243, 7
  %v245 = vsub.s32 6, %v244
  %v246 = vrot.slane %v176, %v245
  %v247 = vmul.f32 %v241, %v246
  %v248 = vadd.f32 %v238, %v247
  %249 = vset.pattern.permute.xlu0 7
  %250 = vperm.xlu0 %249, %v178
  %v251 = vpop.permute.xlu0 %250
  %v253 = vlaneseq
  %v254 = vshrl.u32 %v253, 7
  %v255 = vsub.s32 7, %v254
  %v256 = vrot.slane %v176, %v255
  %v257 = vmul.f32 %v251, %v256
  %v258 = vadd.f32 %v248, %v257
  %v259 = vmax.f32 %v258, 0.0
  %s260 = scalar_lea.vmem %s1, 24
  %v261 = vld [vmem:[%s260] sm:$0xff]
  %263 = vset.pattern.permute.xlu0 0
  %264 = vperm.xlu0 %263, %v261
  %v265 = vpop.permute.xlu0 %264
  %v267 = vlaneseq
  %v268 = vshrl.u32 %v267, 7
  %v269 = vsub.s32 0, %v268
  %v270 = vrot.slane %v259, %v269
  %v271 = vmul.f32 %v265, %v270
  %272 = vset.pattern.permute.xlu0 1
  %273 = vperm.xlu0 %272, %v261
  %v274 = vpop.permute.xlu0 %273
  %v276 = vlaneseq
  %v277 = vshrl.u32 %v276, 7
  %v278 = vsub.s32 1, %v277
  %v279 = vrot.slane %v259, %v278
  %v280 = vmul.f32 %v274, %v279
  %v281 = vadd.f32 %v271, %v280
  %282 = vset.pattern.permute.xlu0 2
  %283 = vperm.xlu0 %282, %v261
  %v284 = vpop.permute.xlu0 %283
  %v286 = vlaneseq
  %v287 = vshrl.u32 %v286, 7
  %v288 = vsub.s32 2, %v287
  %v289 = vrot.slane %v259, %v288
  %v290 = vmul.f32 %v284, %v289
  %v291 = vadd.f32 %v281, %v290
  %292 = vset.pattern.permute.xlu0 3
  %293 = vperm.xlu0 %292, %v261
  %v294 = vpop.permute.xlu0 %293
  %v296 = vlaneseq
  %v297 = vshrl.u32 %v296, 7
  %v298 = vsub.s32 3, %v297
  %v299 = vrot.slane %v259, %v298
  %v300 = vmul.f32 %v294, %v299
  %v301 = vadd.f32 %v291, %v300
  %302 = vset.pattern.permute.xlu0 4
  %303 = vperm.xlu0 %302, %v261
  %v304 = vpop.permute.xlu0 %303
  %v306 = vlaneseq
  %v307 = vshrl.u32 %v306, 7
  %v308 = vsub.s32 4, %v307
  %v309 = vrot.slane %v259, %v308
  %v310 = vmul.f32 %v304, %v309
  %v311 = vadd.f32 %v301, %v310
  %312 = vset.pattern.permute.xlu0 5
  %313 = vperm.xlu0 %312, %v261
  %v314 = vpop.permute.xlu0 %313
  %v316 = vlaneseq
  %v317 = vshrl.u32 %v316, 7
  %v318 = vsub.s32 5, %v317
  %v319 = vrot.slane %v259, %v318
  %v320 = vmul.f32 %v314, %v319
  %v321 = vadd.f32 %v311, %v320
  %322 = vset.pattern.permute.xlu0 6
  %323 = vperm.xlu0 %322, %v261
  %v324 = vpop.permute.xlu0 %323
  %v326 = vlaneseq
  %v327 = vshrl.u32 %v326, 7
  %v328 = vsub.s32 6, %v327
  %v329 = vrot.slane %v259, %v328
  %v330 = vmul.f32 %v324, %v329
  %v331 = vadd.f32 %v321, %v330
  %332 = vset.pattern.permute.xlu0 7
  %333 = vperm.xlu0 %332, %v261
  %v334 = vpop.permute.xlu0 %333
  %v336 = vlaneseq
  %v337 = vshrl.u32 %v336, 7
  %v338 = vsub.s32 7, %v337
  %v339 = vrot.slane %v259, %v338
  %v340 = vmul.f32 %v334, %v339
  %v341 = vadd.f32 %v331, %v340
  %v342 = vmax.f32 %v341, 0.0
  %s343 = scalar_lea.vmem %s1, 32
  %v344 = vld [vmem:[%s343] sm:$0xff]
  %346 = vset.pattern.permute.xlu0 0
  %347 = vperm.xlu0 %346, %v344
  %v348 = vpop.permute.xlu0 %347
  %v350 = vlaneseq
  %v351 = vshrl.u32 %v350, 7
  %v352 = vsub.s32 0, %v351
  %v353 = vrot.slane %v342, %v352
  %v354 = vmul.f32 %v348, %v353
  %355 = vset.pattern.permute.xlu0 1
  %356 = vperm.xlu0 %355, %v344
  %v357 = vpop.permute.xlu0 %356
  %v359 = vlaneseq
  %v360 = vshrl.u32 %v359, 7
  %v361 = vsub.s32 1, %v360
  %v362 = vrot.slane %v342, %v361
  %v363 = vmul.f32 %v357, %v362
  %v364 = vadd.f32 %v354, %v363
  %365 = vset.pattern.permute.xlu0 2
  %366 = vperm.xlu0 %365, %v344
  %v367 = vpop.permute.xlu0 %366
  %v369 = vlaneseq
  %v370 = vshrl.u32 %v369, 7
  %v371 = vsub.s32 2, %v370
  %v372 = vrot.slane %v342, %v371
  %v373 = vmul.f32 %v367, %v372
  %v374 = vadd.f32 %v364, %v373
  %375 = vset.pattern.permute.xlu0 3
  %376 = vperm.xlu0 %375, %v344
  %v377 = vpop.permute.xlu0 %376
  %v379 = vlaneseq
  %v380 = vshrl.u32 %v379, 7
  %v381 = vsub.s32 3, %v380
  %v382 = vrot.slane %v342, %v381
  %v383 = vmul.f32 %v377, %v382
  %v384 = vadd.f32 %v374, %v383
  %385 = vset.pattern.permute.xlu0 4
  %386 = vperm.xlu0 %385, %v344
  %v387 = vpop.permute.xlu0 %386
  %v389 = vlaneseq
  %v390 = vshrl.u32 %v389, 7
  %v391 = vsub.s32 4, %v390
  %v392 = vrot.slane %v342, %v391
  %v393 = vmul.f32 %v387, %v392
  %v394 = vadd.f32 %v384, %v393
  %395 = vset.pattern.permute.xlu0 5
  %396 = vperm.xlu0 %395, %v344
  %v397 = vpop.permute.xlu0 %396
  %v399 = vlaneseq
  %v400 = vshrl.u32 %v399, 7
  %v401 = vsub.s32 5, %v400
  %v402 = vrot.slane %v342, %v401
  %v403 = vmul.f32 %v397, %v402
  %v404 = vadd.f32 %v394, %v403
  %405 = vset.pattern.permute.xlu0 6
  %406 = vperm.xlu0 %405, %v344
  %v407 = vpop.permute.xlu0 %406
  %v409 = vlaneseq
  %v410 = vshrl.u32 %v409, 7
  %v411 = vsub.s32 6, %v410
  %v412 = vrot.slane %v342, %v411
  %v413 = vmul.f32 %v407, %v412
  %v414 = vadd.f32 %v404, %v413
  %415 = vset.pattern.permute.xlu0 7
  %416 = vperm.xlu0 %415, %v344
  %v417 = vpop.permute.xlu0 %416
  %v419 = vlaneseq
  %v420 = vshrl.u32 %v419, 7
  %v421 = vsub.s32 7, %v420
  %v422 = vrot.slane %v342, %v421
  %v423 = vmul.f32 %v417, %v422
  %v424 = vadd.f32 %v414, %v423
  %v426 = vrot.slane %v424, 1
  %v428 = vsub.f32 %v424, %v426
  %v429 = vmul.f32 %v428, 1.442695
  %v430 = vpow.pop %v429
  %v431 = vadd.f32 %v430, 1.0
  %v432 = vrcp.pop %v431
  %v433 = vmul.f32 1.0, %v432
  %v434 = vsub.f32 1.0, %v433
  %435 = vst [vmem:[%s2] sm:$0xff] 0.0
  %436 = vst [vmem:[%s2] sm:$0x1] %v434
  %437 = vst [vmem:[%s2 + $0x1] sm:$0x1] %v433
  // Predicated region
  $region10: #{titanic_forward.1} parent=0 // pred_check
    _
  $region11: #{titanic_forward.1} parent=0 // pred_check_branch
    %439 = sbr.rel (0) target = $region13
  $region12: #{titanic_forward.1} parent=0 // pred_region
    _
  $region13: #{titanic_forward.1} parent=0 // pred_fallthru
    _
  // Predicated region
  $region14: #{titanic_forward.1} parent=0 // pred_check
    _
  $region15: #{titanic_forward.1} parent=0 // pred_check_branch
    %441 = sbr.rel (0) target = $region17
  $region16: #{titanic_forward.1} parent=0 // pred_region
    _
  $region17: #{titanic_forward.1} parent=0 // pred_fallthru
    _

</llo_original>
